<compile_context>
chip_gen: v5e
topology: v5e:2x2
jax: 0.10.0
libtpu: 0.0.40
codegen_flags: <defaults>
</compile_context>

<pallas_src>
import jax
import jax.numpy as jnp
from jax import lax
from jax.experimental import pallas as pl
from jax.experimental.pallas import tpu as pltpu


def _round_up(x, m):
    return (x + m - 1) // m * m


# ---------------------------------------------------------------------------
# Kernels
# ---------------------------------------------------------------------------

def _mexican_hat_store(wx, p_ref, o_ref):
    # p_ref: (2, TN) f32 -- row 0 = bias/scale, row 1 = 1/scale.
    # z = (wx - bias) / scale  ==  wx * (1/scale) - bias*(1/scale)
    z = wx * p_ref[1:2, :] - p_ref[0:1, :]
    z2 = z * z
    o_ref[...] = ((1.0 - z2) * jnp.exp(-0.5 * z2)).astype(o_ref.dtype)


def wavelet_kernel(x_ref, w_ref, p_ref, o_ref):
    # x_ref: (TB, D), w_ref: (TN, D), o_ref: (TB, TN).  Full contraction.
    wx = lax.dot_general(
        x_ref[...], w_ref[...],
        dimension_numbers=(((1,), (1,)), ((), ())),   # x @ W.T on the MXU
        preferred_element_type=jnp.float32)
    _mexican_hat_store(wx, p_ref, o_ref)


def wavelet_kernel_ktiled(x_ref, w_ref, p_ref, o_ref, acc_ref):
    # x_ref: (TB, TK), w_ref: (TN, TK), acc_ref: (TB, TN) f32 scratch.
    k = pl.program_id(2)

    @pl.when(k == 0)
    def _():
        acc_ref[...] = jnp.zeros_like(acc_ref)

    acc_ref[...] += lax.dot_general(
        x_ref[...], w_ref[...],
        dimension_numbers=(((1,), (1,)), ((), ())),
        preferred_element_type=jnp.float32)

    @pl.when(k == pl.num_programs(2) - 1)
    def _():
        _mexican_hat_store(acc_ref[...], p_ref, o_ref)


# ---------------------------------------------------------------------------
# Hardware query + tile selection
# ---------------------------------------------------------------------------

def _tpu_info():
    try:
        return pltpu.get_tpu_info()
    except Exception:
        return None


def _vmem_budget(info):
    cap = getattr(info, "vmem_capacity_bytes", None) if info is not None else None
    try:
        cap = int(cap)
    except (TypeError, ValueError):
        cap = 0
    if cap <= 0:
        cap = 64 * 1024 * 1024          # v7x per-TC minimum -> safe everywhere
    return int(cap) * 3 // 4            # headroom for Mosaic internal scratch


def _num_tensorcores(info):
    if info is not None:
        for attr in ("num_tensorcores", "tensorcore_count", "num_cores", "core_count"):
            v = getattr(info, attr, None)
            try:
                v = int(v)
            except (TypeError, ValueError):
                continue
            if v > 0:
                return v
    return 1                            # unknown -> assume single TC (no split)


def _pick_min_pad(extent, candidates):
    """Smallest padding waste; ties broken by the larger tile (fewer grid steps)."""
    best = None
    for c in candidates:
        pad = _round_up(extent, c) - extent
        if best is None or pad < best[1] or (pad == best[1] and c > best[0]):
            best = (c, pad)
    return best[0]


def _choose_tiles(B, D, N, in_itemsize, out_itemsize, budget, num_cores):
    # Sub-32-bit MXU operands pack along sublanes: align the batch tile to the
    # packed sublane count (16 for bf16, 32 for 8-bit).
    sub = {4: 8, 2: 16, 1: 32}.get(in_itemsize, 8)

    def pick_tb(cap):
        hi = min(cap, _round_up(B, sub))
        return _pick_min_pad(B, range(sub, hi + 1, sub))

    def pick_tn(cap):
        hi = min(cap, _round_up(N, 128))
        return _pick_min_pad(N, range(128, hi + 1, 128))

    tb = pick_tb(512)
    tn = pick_tn(1024)
    tk = D                              # full contraction per step (no K axis)
    k_tiled = False

    def footprint(tb_, tn_, tk_, k_tiled_):
        f = (2 * tb_ * tk_ * in_itemsize        # x tile   (double-buffered)
             + 2 * tn_ * tk_ * in_itemsize      # W tile   (double-buffered)
             + 2 * 8 * tn_ * 4                  # (2, tn) param rows, sublane-padded
             + 2 * tb_ * tn_ * out_itemsize)    # out tile (double-buffered)
        if k_tiled_:
            f += tb_ * tn_ * 4                  # f32 accumulator scratch
        return f

    # Shrink in priority order: contraction depth first (keeps the output tile
    # lane-dense at any D), then batch rows, then lane width.
    while footprint(tb, tn, tk, k_tiled) > budget:
        if not k_tiled and D > 512:
            k_tiled = True
            tk = _pick_min_pad(D, range(128, 513, 128))
        elif k_tiled and tk > 128:
            tk = max(128, _round_up(tk // 2, 128))
        elif tb > sub:
            tb = max(sub, _round_up(tb // 2, sub))
        elif tn > 128:
            tn = max(128, _round_up(tn // 2, 128))
        else:
            break                               # already at minimum tiles

    # Only on a multi-TensorCore chip (v7x): a degenerate 1-block grid would
    # starve the second core, so split the N axis in two when that is free.
    if (num_cores > 1 and tn % 256 == 0
            and (_round_up(N, tn) // tn) * (_round_up(B, tb) // tb) == 1):
        tn //= 2

    return tb, tn, tk, k_tiled


# ---------------------------------------------------------------------------
# Wrapper
# ---------------------------------------------------------------------------

def wavelet_neuron_layer(x, weights, bias, scale, *,
                         matmul_dtype=None, out_dtype=jnp.float32,
                         _force_tiles=None):
    """x: (B, D); weights: (N, D); bias/scale: (N,).  Returns (B, N) out_dtype."""
    B, D = x.shape
    N, Dw = weights.shape
    assert D == Dw, "weights must be (num_neurons, input_dim)"
    if matmul_dtype is None:
        matmul_dtype = x.dtype
    in_it = jnp.dtype(matmul_dtype).itemsize
    out_it = jnp.dtype(out_dtype).itemsize

    info = _tpu_info()
    budget = _vmem_budget(info)
    if _force_tiles is not None:
        tb, tn, tk, k_tiled = _force_tiles
    else:
        tb, tn, tk, k_tiled = _choose_tiles(
            B, D, N, in_it, out_it, budget, _num_tensorcores(info))

    b_pad = _round_up(B, tb)
    n_pad = _round_up(N, tn)
    d_pad = _round_up(D, tk) if k_tiled else D

    # W stays in its PyTorch (N, D) layout; the kernel contracts the last dims
    # directly, so there is no transpose pass through HBM.
    x_p = x.astype(matmul_dtype)
    w_p = weights.astype(matmul_dtype)

    # Fold scale/bias so the kernel epilogue has no per-element divide.
    inv_scale = (1.0 / scale).astype(jnp.float32)
    params = jnp.stack([bias.astype(jnp.float32) * inv_scale, inv_scale])   # (2, N)

    if b_pad != B or d_pad != D:
        x_p = jnp.pad(x_p, ((0, b_pad - B), (0, d_pad - D)))
    if n_pad != N or d_pad != D:
        w_p = jnp.pad(w_p, ((0, n_pad - N), (0, d_pad - D)))
    if n_pad != N:
        # Zero-padding both rows keeps padded lanes finite (z = 0 -> y = 1.0);
        # padded rows/columns are sliced off below.
        params = jnp.pad(params, ((0, 0), (0, n_pad - N)))

    if k_tiled:
        grid = (n_pad // tn, b_pad // tb, d_pad // tk)
        kernel = wavelet_kernel_ktiled
        in_specs = [
            pl.BlockSpec((tb, tk), lambda j, i, k: (i, k)),    # x tile
            pl.BlockSpec((tn, tk), lambda j, i, k: (j, k)),    # W tile (N, D layout)
            pl.BlockSpec((2, tn), lambda j, i, k: (0, j)),     # [bias/scale; 1/scale]
        ]
        out_specs = pl.BlockSpec((tb, tn), lambda j, i, k: (i, j))
        scratch_shapes = [pltpu.VMEM((tb, tn), jnp.float32)]
        dim_sems = ("parallel", "arbitrary", "arbitrary")
    else:
        grid = (n_pad // tn, b_pad // tb)     # N outer: W tile resident across i
        kernel = wavelet_kernel
        in_specs = [
            pl.BlockSpec((tb, D), lambda j, i: (i, 0)),        # x tile
            pl.BlockSpec((tn, D), lambda j, i: (j, 0)),        # W tile (N, D layout)
            pl.BlockSpec((2, tn), lambda j, i: (0, j)),        # [bias/scale; 1/scale]
        ]
        out_specs = pl.BlockSpec((tb, tn), lambda j, i: (i, j))
        scratch_shapes = []
        dim_sems = ("parallel", "arbitrary")

    cost = pl.CostEstimate(
        flops=2 * b_pad * n_pad * d_pad + 6 * b_pad * n_pad,
        transcendentals=b_pad * n_pad,
        bytes_accessed=(b_pad * d_pad * in_it + n_pad * d_pad * in_it
                        + 2 * n_pad * 4 + b_pad * n_pad * out_it))

    out = pl.pallas_call(
        kernel,
        out_shape=jax.ShapeDtypeStruct((b_pad, n_pad), out_dtype),
        grid_spec=pltpu.PrefetchScalarGridSpec(
            num_scalar_prefetch=0,
            grid=grid,
            in_specs=in_specs,
            out_specs=out_specs,
            scratch_shapes=scratch_shapes),
        compiler_params=pltpu.CompilerParams(
            dimension_semantics=dim_sems,
            vmem_limit_bytes=int(budget)),
        cost_estimate=cost,
    )(x_p, w_p, params)

    if b_pad != B or n_pad != N:
        out = out[:B, :N]
    return out


def wavelet_neuron_layer_ref(x, weights, bias, scale):
    wx = x @ weights.T
    z = (wx - bias[None, :]) / scale[None, :]
    return (1.0 - z ** 2) * jnp.exp(-z ** 2 / 2.0)


if __name__ == "__main__":
    # Small shapes consistent with the module: batch=8, input_dim=32, neurons=256.
    B, D, N = 8, 32, 256

    key = jax.random.PRNGKey(0)
    kx, kw, kb = jax.random.split(key, 3)

    x = jax.random.normal(kx, (B, D), dtype=jnp.float32)
    weights = jax.random.normal(kw, (N, D), dtype=jnp.float32)   # torch.randn(N, D)
    bias = jax.random.normal(kb, (N,), dtype=jnp.float32)        # torch.randn(N)
    scale = jnp.ones((N,), dtype=jnp.float32)                    # torch.ones(N)

    ref = wavelet_neuron_layer_ref(x, weights, bias, scale)

    # 1) Default f32 path: exact module semantics (single-step contraction).
    out = jax.block_until_ready(wavelet_neuron_layer(x, weights, bias, scale))
    assert out.shape == (B, N)
    assert jnp.allclose(out, ref, atol=1e-4, rtol=1e-4), "f32 path mismatch"

    # 2) Exercise the K-tiled accumulator kernel (forced small tiles, D=256).
    Dk = 256
    xk = jax.random.normal(kx, (B, Dk), dtype=jnp.float32)
    wk = jax.random.normal(kw, (N, Dk), dtype=jnp.float32)
    out_k = jax.block_until_ready(
        wavelet_neuron_layer(xk, wk, bias, scale,
                             _force_tiles=(8, 128, 128, True)))
    ref_k = wavelet_neuron_layer_ref(xk, wk, bias, scale)
    assert out_k.shape == (B, N)
    assert jnp.allclose(out_k, ref_k, atol=1e-4, rtol=1e-4), "K-tiled path mismatch"

    # 3) Reduced-HBM path: bf16 matmul operands + bf16 output storage.
    out_bf16 = jax.block_until_ready(
        wavelet_neuron_layer(x, weights, bias, scale,
                             matmul_dtype=jnp.bfloat16, out_dtype=jnp.bfloat16))
    ref_bf16 = wavelet_neuron_layer_ref(
        x.astype(jnp.bfloat16).astype(jnp.float32),
        weights.astype(jnp.bfloat16).astype(jnp.float32), bias, scale)
    assert jnp.allclose(out_bf16.astype(jnp.float32), ref_bf16,
                        atol=3e-2, rtol=3e-2), "bf16 path mismatch"

    print("KERNEL_OK")
</pallas_src>

<mosaic_0001>
module attributes {stable_mosaic.version = 11 : i64} {
  func.func @wavelet_kernel(%arg0: i32, %arg1: i32, %arg2: memref<8x32xf32, #tpu.memory_space<vmem>>, %arg3: memref<256x32xf32, #tpu.memory_space<vmem>>, %arg4: memref<2x256xf32, #tpu.memory_space<vmem>>, %arg5: memref<8x256xf32, #tpu.memory_space<vmem>>) attributes {dimension_semantics = [#tpu.dimension_semantics<parallel>, #tpu.dimension_semantics<arbitrary>], iteration_bounds = array<i64: 1, 1>, scalar_prefetch = 0 : i64, scratch_operands = 0 : i64, tpu.core_type = #tpu.core_type<tc>, window_params = [{transform_indices = @transform_0, window_bounds = array<i64: 8, 32>}, {transform_indices = @transform_1, window_bounds = array<i64: 256, 32>}, {transform_indices = @transform_2, window_bounds = array<i64: 2, 256>}, {transform_indices = @transform_3, window_bounds = array<i64: 8, 256>}]} {
    %c0 = arith.constant 0 : index
    %c0_0 = arith.constant 0 : index
    %0 = vector.load %arg2[%c0, %c0_0] : memref<8x32xf32, #tpu.memory_space<vmem>>, vector<8x32xf32>
    %c0_1 = arith.constant 0 : index
    %c0_2 = arith.constant 0 : index
    %1 = vector.load %arg3[%c0_1, %c0_2] : memref<256x32xf32, #tpu.memory_space<vmem>>, vector<256x32xf32>
    %cst = arith.constant dense<0.000000e+00> : vector<8x256xf32>
    %2 = tpu.matmul %0, %1, %cst {dimension_numbers = #tpu.dot_dimension_numbers<[1], [1], [0], [0], [0, 0, 1, 0], [], []>} : vector<8x32xf32>, vector<256x32xf32>, vector<8x256xf32> -> vector<8x256xf32>
    %c1 = arith.constant 1 : index
    %c0_3 = arith.constant 0 : index
    %3 = vector.load %arg4[%c1, %c0_3] : memref<2x256xf32, #tpu.memory_space<vmem>>, vector<1x256xf32>
    %4 = vector.broadcast %3 : vector<1x256xf32> to vector<8x256xf32>
    %5 = arith.mulf %2, %4 : vector<8x256xf32>
    %c0_4 = arith.constant 0 : index
    %c0_5 = arith.constant 0 : index
    %6 = vector.load %arg4[%c0_4, %c0_5] : memref<2x256xf32, #tpu.memory_space<vmem>>, vector<1x256xf32>
    %7 = vector.broadcast %6 : vector<1x256xf32> to vector<8x256xf32>
    %8 = arith.subf %5, %7 : vector<8x256xf32>
    %9 = arith.mulf %8, %8 : vector<8x256xf32>
    %cst_6 = arith.constant 1.000000e+00 : f32
    %10 = vector.broadcast %cst_6 : f32 to vector<8x256xf32>
    %11 = arith.subf %10, %9 : vector<8x256xf32>
    %cst_7 = arith.constant -5.000000e-01 : f32
    %12 = vector.broadcast %cst_7 : f32 to vector<8x256xf32>
    %13 = arith.mulf %12, %9 : vector<8x256xf32>
    %14 = math.exp %13 : vector<8x256xf32>
    %15 = arith.mulf %11, %14 : vector<8x256xf32>
    %c0_8 = arith.constant 0 : index
    %c0_9 = arith.constant 0 : index
    %16 = vector.load %arg5[%c0_8, %c0_9] : memref<8x256xf32, #tpu.memory_space<vmem>>, vector<8x256xf32>
    tpu.vector_store %arg5[%c0_8, %c0_9], %15 {strides = array<i32>} : memref<8x256xf32, #tpu.memory_space<vmem>>, vector<8x256xf32>,
    return
  }
  func.func @transform_0(%arg0: i32, %arg1: i32) -> (i32, i32) {
    %c0_i32 = arith.constant 0 : i32
    %c0_i32_0 = arith.constant 0 : i32
    return %arg1, %c0_i32 : i32, i32
  }
  func.func @transform_1(%arg0: i32, %arg1: i32) -> (i32, i32) {
    %c0_i32 = arith.constant 0 : i32
    %c0_i32_0 = arith.constant 0 : i32
    return %arg0, %c0_i32 : i32, i32
  }
  func.func @transform_2(%arg0: i32, %arg1: i32) -> (i32, i32) {
    %c0_i32 = arith.constant 0 : i32
    %c0_i32_0 = arith.constant 0 : i32
    return %c0_i32, %arg0 : i32, i32
  }
  func.func @transform_3(%arg0: i32, %arg1: i32) -> (i32, i32) {
    %c0_i32 = arith.constant 0 : i32
    return %arg1, %arg0 : i32, i32
  }
}

</mosaic_0001>

<llo_original>
// kernel: tpu_custom_call.1
$region0: #{tpu_custom_call.1}
  #allocation0 [shape = 'u32[]', space=smem, size = 0x4, offset = 0x4, fixed_abs, tag = 'smem constant byte address 0x4 - core index']
  #allocation1 [shape = 'u32[72,128]{1,0:T(1,128)}', space=vmem, size = 0x9000, scoped, tag = 'internal scratch']
  %s0 = inlined_call_operand.vmem [shape: f32[8,32], index: 0, kind: input, shape index: {}]
  %s1 = inlined_call_operand.vmem [shape: f32[256,32], index: 1, kind: input, shape index: {}]
  %s2 = inlined_call_operand.vmem [shape: f32[2,256], index: 2, kind: input, shape index: {}]
  %s3 = inlined_call_operand.hbm [shape: f32[8,256], index: 3, kind: output, shape index: {}]
  %s4 = sld [smem:[#allocation0]]
  $region22: #{tpu_custom_call.1} parent=0
    _
  %s6 = ssub.s32 1, %s4
  %s7 = scalar_select 0, %s6, %s4
  $region1: #{tpu_custom_call.1} parent=0
    #allocation2 [shape = 'u8[8192]{0}', space=vmem, size = 0x2000, scoped, tag = 'output window, operand 0, single buffered']
    #allocation3 [shape = 's32[1]{0}', space=sflag, size = 0x4, scoped, tag = 'scoped memory for tpu_custom_call.1']
    %8 = vsyncpa [#allocation3], 0
    // Predicated region
    $region2: #{tpu_custom_call.1} parent=1 // pred_check
      _
    $region3: #{tpu_custom_call.1} parent=1 // pred_check_branch
      %10 = sbr.rel (0) target = $region5
    $region4: #{tpu_custom_call.1} parent=1 // pred_region
      _
    $region5: #{tpu_custom_call.1} parent=1 // pred_fallthru
      _
    // Predicated region
    $region6: #{tpu_custom_call.1} parent=1 // pred_check
      _
    $region7: #{tpu_custom_call.1} parent=1 // pred_check_branch
      %12 = sbr.rel (0) target = $region9
    $region8: #{tpu_custom_call.1} parent=1 // pred_region
      _
    $region9: #{tpu_custom_call.1} parent=1 // pred_fallthru
      _
    // Predicated region
    $region10: #{tpu_custom_call.1} parent=1 // pred_check
      _
    $region11: #{tpu_custom_call.1} parent=1 // pred_check_branch
      %14 = sbr.rel (0) target = $region13
    $region12: #{tpu_custom_call.1} parent=1 // pred_region
      _
    $region13: #{tpu_custom_call.1} parent=1 // pred_fallthru
      _
    %v15 = vld [vmem:[%s0] sm:$0xff]
    %v16 = vld [vmem:[%s1] sm:$0xff]
    %v17 = vld [vmem:[%s1 + $0x8] sm:$0xff]
    %v18 = vld [vmem:[%s1 + $0x10] sm:$0xff]
    %v19 = vld [vmem:[%s1 + $0x18] sm:$0xff]
    %v20 = vld [vmem:[%s1 + $0x20] sm:$0xff]
    %v21 = vld [vmem:[%s1 + $0x28] sm:$0xff]
    %v22 = vld [vmem:[%s1 + $0x30] sm:$0xff]
    %v23 = vld [vmem:[%s1 + $0x38] sm:$0xff]
    %v24 = vld [vmem:[%s1 + $0x40] sm:$0xff]
    %v25 = vld [vmem:[%s1 + $0x48] sm:$0xff]
    %v26 = vld [vmem:[%s1 + $0x50] sm:$0xff]
    %v27 = vld [vmem:[%s1 + $0x58] sm:$0xff]
    %v28 = vld [vmem:[%s1 + $0x60] sm:$0xff]
    %v29 = vld [vmem:[%s1 + $0x68] sm:$0xff]
    %v30 = vld [vmem:[%s1 + $0x70] sm:$0xff]
    %v31 = vld [vmem:[%s1 + $0x78] sm:$0xff]
    %v32 = vld [vmem:[%s1 + $0x80] sm:$0xff]
    %v33 = vld [vmem:[%s1 + $0x88] sm:$0xff]
    %v34 = vld [vmem:[%s1 + $0x90] sm:$0xff]
    %v35 = vld [vmem:[%s1 + $0x98] sm:$0xff]
    %v36 = vld [vmem:[%s1 + $0xa0] sm:$0xff]
    %v37 = vld [vmem:[%s1 + $0xa8] sm:$0xff]
    %v38 = vld [vmem:[%s1 + $0xb0] sm:$0xff]
    %v39 = vld [vmem:[%s1 + $0xb8] sm:$0xff]
    %v40 = vld [vmem:[%s1 + $0xc0] sm:$0xff]
    %v41 = vld [vmem:[%s1 + $0xc8] sm:$0xff]
    %v42 = vld [vmem:[%s1 + $0xd0] sm:$0xff]
    %v43 = vld [vmem:[%s1 + $0xd8] sm:$0xff]
    %v44 = vld [vmem:[%s1 + $0xe0] sm:$0xff]
    %v45 = vld [vmem:[%s1 + $0xe8] sm:$0xff]
    %v46 = vld [vmem:[%s1 + $0xf0] sm:$0xff]
    %v47 = vld [vmem:[%s1 + $0xf8] sm:$0xff]
    %vm48 = vcmask 261120
    %v50 = vsel %vm48, %v15, 0
    %v53 = vsel %vm48, %v16, 0
    %v56 = vsel %vm48, %v17, 0
    %v59 = vsel %vm48, %v18, 0
    %v62 = vsel %vm48, %v19, 0
    %v65 = vsel %vm48, %v20, 0
    %v68 = vsel %vm48, %v21, 0
    %v71 = vsel %vm48, %v22, 0
    %v74 = vsel %vm48, %v23, 0
    %v77 = vsel %vm48, %v24, 0
    %v80 = vsel %vm48, %v25, 0
    %v83 = vsel %vm48, %v26, 0
    %v86 = vsel %vm48, %v27, 0
    %v89 = vsel %vm48, %v28, 0
    %v92 = vsel %vm48, %v29, 0
    %v95 = vsel %vm48, %v30, 0
    %v98 = vsel %vm48, %v31, 0
    %v101 = vsel %vm48, %v32, 0
    %v104 = vsel %vm48, %v33, 0
    %v107 = vsel %vm48, %v34, 0
    %v110 = vsel %vm48, %v35, 0
    %v113 = vsel %vm48, %v36, 0
    %v116 = vsel %vm48, %v37, 0
    %v119 = vsel %vm48, %v38, 0
    %v122 = vsel %vm48, %v39, 0
    %v125 = vsel %vm48, %v40, 0
    %v128 = vsel %vm48, %v41, 0
    %v131 = vsel %vm48, %v42, 0
    %v134 = vsel %vm48, %v43, 0
    %v137 = vsel %vm48, %v44, 0
    %v140 = vsel %vm48, %v45, 0
    %v143 = vsel %vm48, %v46, 0
    %v146 = vsel %vm48, %v47, 0
    %148 = vmatpush.xpose.msra.mxu0 %v98
    %149 = vmatpush.xpose.msra.mxu0 %v95
    %150 = vmatpush.xpose.msra.mxu0 %v92
    %151 = vmatpush.xpose.msra.mxu0 %v89
    %152 = vmatpush.xpose.msra.mxu0 %v86
    %153 = vmatpush.xpose.msra.mxu0 %v83
    %154 = vmatpush.xpose.msra.mxu0 %v80
    %155 = vmatpush.xpose.msra.mxu0 %v77
    %156 = vmatpush.xpose.msra.mxu0 %v74
    %157 = vmatpush.xpose.msra.mxu0 %v71
    %158 = vmatpush.xpose.msra.mxu0 %v68
    %159 = vmatpush.xpose.msra.mxu0 %v65
    %160 = vmatpush.xpose.msra.mxu0 %v62
    %161 = vmatpush.xpose.msra.mxu0 %v59
    %162 = vmatpush.xpose.msra.mxu0 %v56
    %163 = vmatpush.xpose.msra.mxu0 %v53
    %164 = vmatmul.f32.gmra.mxu0 %v50
    %v165 = vpop.f32.mrf.mxu0
    %v166 = vadd.f32 0.0, %v165
    %167 = vdwg.mxu0
    %168 = vmatpush.xpose.msra.mxu0 %v146
    %169 = vmatpush.xpose.msra.mxu0 %v143
    %170 = vmatpush.xpose.msra.mxu0 %v140
    %171 = vmatpush.xpose.msra.mxu0 %v137
    %172 = vmatpush.xpose.msra.mxu0 %v134
    %173 = vmatpush.xpose.msra.mxu0 %v131
    %174 = vmatpush.xpose.msra.mxu0 %v128
    %175 = vmatpush.xpose.msra.mxu0 %v125
    %176 = vmatpush.xpose.msra.mxu0 %v122
    %177 = vmatpush.xpose.msra.mxu0 %v119
    %178 = vmatpush.xpose.msra.mxu0 %v116
    %179 = vmatpush.xpose.msra.mxu0 %v113
    %180 = vmatpush.xpose.msra.mxu0 %v110
    %181 = vmatpush.xpose.msra.mxu0 %v107
    %182 = vmatpush.xpose.msra.mxu0 %v104
    %183 = vmatpush.xpose.msra.mxu0 %v101
    %184 = vmatmul.f32.gmra.mxu0 %v50
    %v185 = vpop.f32.mrf.mxu0
    %v186 = vadd.f32 0.0, %v185
    %187 = vdwg.mxu0
    %s188 = scalar_lea.vmem %s2, 1
    %v189 = vld [vmem:[%s188] ss:$2 sm:$0x3]
    %v191 = vperm.slane %v189, 0
    %v192 = vperm.slane %v189, 1
    %v195 = vmul.f32 %v166, %v191
    %v196 = vmul.f32 %v186, %v192
    %v197 = vld [vmem:[%s2] ss:$2 sm:$0x3]
    %v199 = vperm.slane %v197, 0
    %v200 = vperm.slane %v197, 1
    %v203 = vsub.f32 %v195, %v199
    %v204 = vsub.f32 %v196, %v200
    %v205 = vmul.f32 %v203, %v203
    %v206 = vmul.f32 %v204, %v204
    %v207 = vsub.f32 1.0, %v205
    %v208 = vsub.f32 1.0, %v206
    %v209 = vmul.f32 %v205, -0.5
    %v210 = vmul.f32 %v206, -0.5
    %v211 = vmul.f32 %v209, 1.442695
    %v212 = vpow.pop %v211
    %v213 = vmul.f32 %v210, 1.442695
    %v214 = vpow.pop %v213
    %v215 = vmul.f32 %v207, %v212
    %v216 = vmul.f32 %v208, %v214
    %217 = vst [vmem:[#allocation2] sm:$0xff] %v215
    %218 = vst [vmem:[#allocation2 + $0x8] sm:$0xff] %v216
    // Predicated region
    $region14: #{tpu_custom_call.1} parent=1 // pred_check
      _
    $region15: #{tpu_custom_call.1} parent=1 // pred_check_branch
      %220 = sbr.rel (0) target = $region17
    $region16: #{tpu_custom_call.1} parent=1 // pred_region
      %222 = vsyncadd [#allocation3], 0
      %s224 = sshll.u32 [#allocation2], 4
      %s225 = int_to_ptr.vmem [resolvable:$true] %s224
      %s226 = sshll.u32 %s3, 4
      %s227 = int_to_ptr.hbm [resolvable:$true] %s226
      %229 = dma.vmem_to_hbm [thread:$0]  %s225, 256, %s227, [#allocation3]
    $region17: #{tpu_custom_call.1} parent=1 // pred_fallthru
      _
    // Predicated region
    $region18: #{tpu_custom_call.1} parent=1 // pred_check
      _
    $region19: #{tpu_custom_call.1} parent=1 // pred_check_branch
      %231 = sbr.rel (0) target = $region21
    $region20: #{tpu_custom_call.1} parent=1 // pred_region
      %233 = dma.done [#allocation3], 256
    $region21: #{tpu_custom_call.1} parent=1 // pred_fallthru
      _
    %234 = vsyncpa [#allocation3], 1

</llo_original>
